<compile_context>
chip_gen: v7x
topology: tpu7x:2x2x1
jax: 0.10.0
libtpu: 0.0.40
codegen_flags: <defaults>
</compile_context>

<pallas_src>
import math

import jax
import jax.numpy as jnp
from jax import lax
from jax.experimental import pallas as pl
from jax.experimental.pallas import tpu as pltpu


def causal_attention_kernel(x_ref, wqkv_ref, o_ref, k_sc, v_sc):
    # x_ref:    (Bb, T, d_in)  float32   (full sequence for this batch block)
    # wqkv_ref: (d_in, 3*d_p)  bfloat16  ([wq*scale | wk | wv], head dim padded to d_p)
    # o_ref:    (Bb, tq, d_p)  float32   (current query tile, lane-dense padded head dim)
    # k_sc/v_sc:(Bb, T, d_p)   bfloat16  (K/V cache for the whole batch block)
    qi = pl.program_id(1)
    Bb, T, d_in = x_ref.shape
    tq = o_ref.shape[1]
    d_p = o_ref.shape[2]

    # ---- K/V for the whole (Bb, T) block: computed once per batch block (first query tile) ----
    @pl.when(qi == 0)
    def _():
        xf = x_ref[...].reshape(Bb * T, d_in).astype(jnp.bfloat16)       # (Bb*T, d_in)
        kv = jnp.dot(xf, wqkv_ref[:, d_p:],                               # (Bb*T, 2*d_p) f32 acc
                     preferred_element_type=jnp.float32)
        kv = kv.reshape(Bb, T, 2 * d_p)
        k_sc[...] = kv[:, :, :d_p].astype(jnp.bfloat16)
        v_sc[...] = kv[:, :, d_p:].astype(jnp.bfloat16)

    # ---- Q for the current query tile (softmax scale already folded into the Q weights) ----
    q_start = pl.multiple_of(qi * tq, 8)
    xq = x_ref[:, pl.ds(q_start, tq), :].reshape(Bb * tq, d_in).astype(jnp.bfloat16)
    q = jnp.dot(xq, wqkv_ref[:, :d_p], preferred_element_type=jnp.float32)  # (Bb*tq, d_p)
    q = q.reshape(Bb, tq, d_p).astype(jnp.bfloat16)

    # ---- scores: contract last dims of q and k (no explicit transpose), f32 accumulation ----
    scores = jnp.einsum("bqd,bkd->bqk", q, k_sc[...],
                        preferred_element_type=jnp.float32)               # (Bb, tq, T)

    # causal mask: key index > global query index -> large negative (NaN-safe vs -inf)
    row = qi * tq + lax.broadcasted_iota(jnp.int32, (Bb, tq, T), 1)
    col = lax.broadcasted_iota(jnp.int32, (Bb, tq, T), 2)
    scores = jnp.where(col > row, jnp.float32(-1e30), scores)

    # softmax in f32; approximate reciprocal runs on the EUP slot
    m = jnp.max(scores, axis=-1, keepdims=True)
    e = jnp.exp(scores - m)
    attn = e * pl.reciprocal(jnp.sum(e, axis=-1, keepdims=True), approx=True)

    # TODO(synk): nn.Dropout(p=0.1) on the attention weights is identity in eval mode;
    #             training-mode stochastic dropout is intentionally omitted.

    ctx = jnp.einsum("bqk,bkd->bqd", attn.astype(jnp.bfloat16), v_sc[...],
                     preferred_element_type=jnp.float32)                  # (Bb, tq, d_p)
    o_ref[...] = ctx.astype(o_ref.dtype)


def causal_attention(x, wq, wk, wv, *, block_b=None, block_q=None):
    """x: (B, T, d_in) f32; wq/wk/wv: (d_in, d_out) f32 (pre-transposed Linear weights).

    Returns (B, T, d_out) f32 — eval-mode forward of the PyTorch CausalAttention module.
    """
    B, T, d_in = x.shape
    d_out = wq.shape[1]
    assert T % 8 == 0, "sequence length must be a multiple of 8 (sublane tile)"

    # Pad head dim to a lane-dense multiple of 128; fold the softmax scale into the Q weights.
    d_p = ((d_out + 127) // 128) * 128
    scale = 1.0 / math.sqrt(d_out)  # keys.shape[-1] ** 0.5 in the PyTorch module

    def pad(w):
        return jnp.pad(w, ((0, 0), (0, d_p - d_out)))

    wqkv = jnp.concatenate([pad(wq) * scale, pad(wk), pad(wv)], axis=1).astype(jnp.bfloat16)

    # Tile sizes: coalesce batch elements per step; tile the query dim for large T.
    if block_q is None:
        block_q = T if T <= 256 else 256
    assert T % block_q == 0 and block_q % 8 == 0
    if block_b is None:
        block_b = 1
        for cand in range(B, 0, -1):
            if B % cand == 0 and cand * T <= 4096:
                block_b = cand
                break
    assert B % block_b == 0

    grid = (B // block_b, T // block_q)

    out = pl.pallas_call(
        causal_attention_kernel,
        out_shape=jax.ShapeDtypeStruct((B, T, d_p), x.dtype),
        grid_spec=pltpu.PrefetchScalarGridSpec(
            num_scalar_prefetch=0,
            grid=grid,
            in_specs=[
                # full sequence for the batch block; does not change across query tiles -> no re-DMA
                pl.BlockSpec((block_b, T, d_in), lambda b, q: (b, 0, 0)),
                # fused [Q*scale | K | V] weights, constant across the grid
                pl.BlockSpec((d_in, 3 * d_p), lambda b, q: (0, 0)),
            ],
            out_specs=pl.BlockSpec((block_b, block_q, d_p), lambda b, q: (b, q, 0)),
            scratch_shapes=[
                pltpu.VMEM((block_b, T, d_p), jnp.bfloat16),  # K cache
                pltpu.VMEM((block_b, T, d_p), jnp.bfloat16),  # V cache
            ],
        ),
        compiler_params=pltpu.CompilerParams(
            # query-tile axis carries the K/V scratch dependency -> "arbitrary"
            dimension_semantics=("parallel", "arbitrary"),
            # above the 32 MiB scoped default, below every generation's physical VMEM
            vmem_limit_bytes=48 * 1024 * 1024,
        ),
    )(x, wqkv)

    return out[:, :, :d_out]


if __name__ == "__main__":
    # Small shapes consistent with the module: batch=2, seq(=context_length)=8, d_in=32, d_out=32
    B, T, d_in, d_out = 2, 8, 32, 32

    key = jax.random.PRNGKey(0)
    kx, kq, kk, kv = jax.random.split(key, 4)

    x = jax.random.normal(kx, (B, T, d_in), dtype=jnp.float32)

    # "nn.Linear"-style init: W ~ U(-1/sqrt(d_in), 1/sqrt(d_in)), stored pre-transposed (d_in, d_out);
    # qkv_bias=False -> no bias.
    bound = 1.0 / math.sqrt(d_in)
    wq = jax.random.uniform(kq, (d_in, d_out), jnp.float32, -bound, bound)
    wk = jax.random.uniform(kk, (d_in, d_out), jnp.float32, -bound, bound)
    wv = jax.random.uniform(kv, (d_in, d_out), jnp.float32, -bound, bound)

    out = causal_attention(x, wq, wk, wv)
    out = jax.block_until_ready(out)

    # Pure-JAX f32 reference (eval-mode dropout = identity).
    q = x @ wq
    k = x @ wk
    v = x @ wv
    scores = jnp.einsum("btd,bsd->bts", q, k)
    mask = jnp.triu(jnp.ones((T, T), dtype=bool), k=1)
    scores = jnp.where(mask[None], -jnp.inf, scores) / math.sqrt(d_out)
    attn = jax.nn.softmax(scores, axis=-1)
    ref = attn @ v

    assert out.shape == (B, T, d_out)
    # bf16 MXU operands + approx reciprocal -> compare at bf16-level tolerance
    assert jnp.allclose(out, ref, atol=3e-2, rtol=3e-2), "mismatch vs JAX reference"

    print("KERNEL_OK")
</pallas_src>

<mosaic_0001>
module attributes {stable_mosaic.version = 11 : i64} {
  func.func @causal_attention_kernel(%arg0: i32, %arg1: i32, %arg2: memref<2x8x32xf32, #tpu.memory_space<vmem>>, %arg3: memref<32x384xbf16, #tpu.memory_space<vmem>>, %arg4: memref<2x8x128xf32, #tpu.memory_space<vmem>>, %arg5: memref<2x8x128xbf16, #tpu.memory_space<vmem>>, %arg6: memref<2x8x128xbf16, #tpu.memory_space<vmem>>) attributes {dimension_semantics = [#tpu.dimension_semantics<parallel>, #tpu.dimension_semantics<arbitrary>], iteration_bounds = array<i64: 1, 1>, scalar_prefetch = 0 : i64, scratch_operands = 2 : i64, tpu.core_type = #tpu.core_type<tc>, window_params = [{transform_indices = @transform_0, window_bounds = array<i64: 2, 8, 32>}, {pipeline_mode = #tpu.pipeline_mode<synchronous>, transform_indices = @transform_1, window_bounds = array<i64: 32, 384>}, {transform_indices = @transform_2, window_bounds = array<i64: 2, 8, 128>}]} {
    %c0_i32 = arith.constant 0 : i32
    %0 = arith.cmpi eq, %arg1, %c0_i32 : i32
    %1 = arith.extui %0 : i1 to i32
    %c0_i32_0 = arith.constant 0 : i32
    %2 = arith.cmpi ne, %1, %c0_i32_0 : i32
    scf.if %2 {
      %c0_19 = arith.constant 0 : index
      %c0_20 = arith.constant 0 : index
      %c0_21 = arith.constant 0 : index
      %37 = vector.load %arg2[%c0_19, %c0_20, %c0_21] : memref<2x8x32xf32, #tpu.memory_space<vmem>>, vector<2x8x32xf32>
      %38 = vector.shape_cast %37 : vector<2x8x32xf32> to vector<16x32xf32>
      %39 = arith.truncf %38 : vector<16x32xf32> to vector<16x32xbf16>
      %c0_22 = arith.constant 0 : index
      %c128 = arith.constant 128 : index
      %40 = vector.load %arg3[%c0_22, %c128] : memref<32x384xbf16, #tpu.memory_space<vmem>>, vector<32x256xbf16>
      %cst_23 = arith.constant dense<0.000000e+00> : vector<16x256xf32>
      %41 = tpu.matmul %39, %40, %cst_23 {dimension_numbers = #tpu.dot_dimension_numbers<[1], [0], [0], [1], [0, 0, 1, 1], [], []>} : vector<16x32xbf16>, vector<32x256xbf16>, vector<16x256xf32> -> vector<16x256xf32>
      %42 = vector.shape_cast %41 : vector<16x256xf32> to vector<2x8x256xf32>
      %43 = vector.extract_strided_slice %42 {offsets = [0, 0, 0], sizes = [2, 8, 128], strides = [1, 1, 1]} : vector<2x8x256xf32> to vector<2x8x128xf32>
      %44 = arith.truncf %43 : vector<2x8x128xf32> to vector<2x8x128xbf16>
      %c0_24 = arith.constant 0 : index
      %c0_25 = arith.constant 0 : index
      %c0_26 = arith.constant 0 : index
      %45 = vector.load %arg5[%c0_24, %c0_25, %c0_26] : memref<2x8x128xbf16, #tpu.memory_space<vmem>>, vector<2x8x128xbf16>
      tpu.vector_store %arg5[%c0_24, %c0_25, %c0_26], %44 {strides = array<i32>} : memref<2x8x128xbf16, #tpu.memory_space<vmem>>, vector<2x8x128xbf16>,
      %46 = vector.extract_strided_slice %42 {offsets = [0, 0, 128], sizes = [2, 8, 128], strides = [1, 1, 1]} : vector<2x8x256xf32> to vector<2x8x128xf32>
      %47 = arith.truncf %46 : vector<2x8x128xf32> to vector<2x8x128xbf16>
      %c0_27 = arith.constant 0 : index
      %c0_28 = arith.constant 0 : index
      %c0_29 = arith.constant 0 : index
      %48 = vector.load %arg6[%c0_27, %c0_28, %c0_29] : memref<2x8x128xbf16, #tpu.memory_space<vmem>>, vector<2x8x128xbf16>
      tpu.vector_store %arg6[%c0_27, %c0_28, %c0_29], %47 {strides = array<i32>} : memref<2x8x128xbf16, #tpu.memory_space<vmem>>, vector<2x8x128xbf16>,
    } else {
    }
    %c8_i32 = arith.constant 8 : i32
    %3 = arith.muli %arg1, %c8_i32 : i32
    %4 = tpu.assume_multiple %3, 8 : i32
    %c0 = arith.constant 0 : index
    %5 = arith.index_cast %4 : i32 to index
    %c0_1 = arith.constant 0 : index
    %6 = vector.load %arg2[%c0, %5, %c0_1] : memref<2x8x32xf32, #tpu.memory_space<vmem>>, vector<2x8x32xf32>
    %7 = vector.shape_cast %6 : vector<2x8x32xf32> to vector<16x32xf32>
    %8 = arith.truncf %7 : vector<16x32xf32> to vector<16x32xbf16>
    %c0_2 = arith.constant 0 : index
    %c0_3 = arith.constant 0 : index
    %9 = vector.load %arg3[%c0_2, %c0_3] : memref<32x384xbf16, #tpu.memory_space<vmem>>, vector<32x128xbf16>
    %cst = arith.constant dense<0.000000e+00> : vector<16x128xf32>
    %10 = tpu.matmul %8, %9, %cst {dimension_numbers = #tpu.dot_dimension_numbers<[1], [0], [0], [1], [0, 0, 1, 1], [], []>} : vector<16x32xbf16>, vector<32x128xbf16>, vector<16x128xf32> -> vector<16x128xf32>
    %11 = vector.shape_cast %10 : vector<16x128xf32> to vector<2x8x128xf32>
    %12 = arith.truncf %11 : vector<2x8x128xf32> to vector<2x8x128xbf16>
    %c0_4 = arith.constant 0 : index
    %c0_5 = arith.constant 0 : index
    %c0_6 = arith.constant 0 : index
    %13 = vector.load %arg5[%c0_4, %c0_5, %c0_6] : memref<2x8x128xbf16, #tpu.memory_space<vmem>>, vector<2x8x128xbf16>
    "tpu.trace_start"() <{level = 10 : i32, message = "bqd,bkd->bqk"}> : () -> ()
    %cst_7 = arith.constant dense<0.000000e+00> : vector<2x8x8xf32>
    %14 = tpu.matmul %12, %13, %cst_7 {dimension_numbers = #tpu.dot_dimension_numbers<[2], [2], [1], [1], [0, 0, 0, 1, 1, 1], [0], [0]>} : vector<2x8x128xbf16>, vector<2x8x128xbf16>, vector<2x8x8xf32> -> vector<2x8x8xf32>
    "tpu.trace_stop"() : () -> ()
    %c8_i32_8 = arith.constant 8 : i32
    %15 = arith.muli %arg1, %c8_i32_8 : i32
    %16 = tpu.iota {dimensions = array<i32: 1>} : vector<2x8x8xi32>
    %17 = vector.broadcast %15 : i32 to vector<2x8x8xi32>
    %18 = arith.addi %17, %16 : vector<2x8x8xi32>
    %19 = tpu.iota {dimensions = array<i32: 2>} : vector<2x8x8xi32>
    %20 = arith.cmpi sgt, %19, %18 : vector<2x8x8xi32>
    %cst_9 = arith.constant -1.000000e+30 : f32
    %21 = vector.broadcast %cst_9 : f32 to vector<2x8x8xf32>
    %22 = arith.select %20, %21, %14 : vector<2x8x8xi1>, vector<2x8x8xf32>
    %cst_10 = arith.constant dense<0xFF800000> : vector<2x8xf32>
    %23 = vector.multi_reduction <maximumf>, %22, %cst_10 [2] : vector<2x8x8xf32> to vector<2x8xf32>
    %24 = vector.shape_cast %23 : vector<2x8xf32> to vector<2x8x1xf32>
    %25 = vector.broadcast %24 : vector<2x8x1xf32> to vector<2x8x8xf32>
    %26 = arith.subf %22, %25 : vector<2x8x8xf32>
    %27 = math.exp %26 : vector<2x8x8xf32>
    %cst_11 = arith.constant dense<0.000000e+00> : vector<2x8xf32>
    %28 = vector.multi_reduction <add>, %27, %cst_11 [2] : vector<2x8x8xf32> to vector<2x8xf32>
    %29 = vector.shape_cast %28 : vector<2x8xf32> to vector<2x8x1xf32>
    %30 = tpu.reciprocal %29 {approx = true} : vector<2x8x1xf32> -> vector<2x8x1xf32>
    %31 = vector.broadcast %30 : vector<2x8x1xf32> to vector<2x8x8xf32>
    %32 = arith.mulf %27, %31 : vector<2x8x8xf32>
    %33 = arith.truncf %32 : vector<2x8x8xf32> to vector<2x8x8xbf16>
    %c0_12 = arith.constant 0 : index
    %c0_13 = arith.constant 0 : index
    %c0_14 = arith.constant 0 : index
    %34 = vector.load %arg6[%c0_12, %c0_13, %c0_14] : memref<2x8x128xbf16, #tpu.memory_space<vmem>>, vector<2x8x128xbf16>
    "tpu.trace_start"() <{level = 10 : i32, message = "bqk,bkd->bqd"}> : () -> ()
    %cst_15 = arith.constant dense<0.000000e+00> : vector<2x8x128xf32>
    %35 = tpu.matmul %33, %34, %cst_15 {dimension_numbers = #tpu.dot_dimension_numbers<[2], [1], [1], [2], [0, 0, 0, 1, 1, 2], [0], [0]>} : vector<2x8x8xbf16>, vector<2x8x128xbf16>, vector<2x8x128xf32> -> vector<2x8x128xf32>
    "tpu.trace_stop"() : () -> ()
    %c0_16 = arith.constant 0 : index
    %c0_17 = arith.constant 0 : index
    %c0_18 = arith.constant 0 : index
    %36 = vector.load %arg4[%c0_16, %c0_17, %c0_18] : memref<2x8x128xf32, #tpu.memory_space<vmem>>, vector<2x8x128xf32>
    tpu.vector_store %arg4[%c0_16, %c0_17, %c0_18], %35 {strides = array<i32>} : memref<2x8x128xf32, #tpu.memory_space<vmem>>, vector<2x8x128xf32>,
    return
  }
  func.func @transform_0(%arg0: i32, %arg1: i32) -> (i32, i32, i32) {
    %c0_i32 = arith.constant 0 : i32
    %c0_i32_0 = arith.constant 0 : i32
    %c0_i32_1 = arith.constant 0 : i32
    return %arg0, %c0_i32, %c0_i32_0 : i32, i32, i32
  }
  func.func @transform_1(%arg0: i32, %arg1: i32) -> (i32, i32) {
    %c0_i32 = arith.constant 0 : i32
    %c0_i32_0 = arith.constant 0 : i32
    %c0_i32_1 = arith.constant 0 : i32
    return %c0_i32, %c0_i32_0 : i32, i32
  }
  func.func @transform_2(%arg0: i32, %arg1: i32) -> (i32, i32, i32) {
    %c0_i32 = arith.constant 0 : i32
    %c0_i32_0 = arith.constant 0 : i32
    return %arg0, %arg1, %c0_i32 : i32, i32, i32
  }
}

</mosaic_0001>

<llo_original>
// kernel: tpu_custom_call.1
$region0: #{tpu_custom_call.1}
  #allocation0 [shape = 'u32[]', space=smem, size = 0x4, offset = 0x4, fixed_abs, tag = 'smem constant byte address 0x4 - core index']
  #allocation1 [shape = 'u32[144,128]{1,0:T(1,128)}', space=vmem, size = 0x12000, scoped, tag = 'internal scratch']
  #allocation2 [shape = 'bf16[2,8,128]{2,1,0:T(8,128)(2,1)}', space=vmem, size = 0x1000, scoped, tag = 'scratch operand']
  #allocation3 [shape = 'bf16[2,8,128]{2,1,0:T(8,128)(2,1)}', space=vmem, size = 0x1000, scoped, tag = 'scratch operand']
  %s0 = inlined_call_operand.hbm [shape: f32[2,8,32], index: 0, kind: input, shape index: {}]
  %s1 = inlined_call_operand.hbm [shape: bf16[32,384], index: 1, kind: input, shape index: {}]
  %s2 = inlined_call_operand.hbm [shape: f32[2,8,128], index: 2, kind: output, shape index: {}]
  %s3 = sld [smem:[#allocation0]]
  $region30: #{tpu_custom_call.1} parent=0
    _
  %s5 = ssub.s32 1, %s3
  %s6 = scalar_select 0, %s5, %s3
  $region1: #{tpu_custom_call.1} parent=0
    #allocation4 [shape = 'u8[8192]{0}', space=vmem, size = 0x2000, scoped, tag = 'input window, operand 0, single buffered']
    #allocation5 [shape = 's32[1]{0}', space=sflag, size = 0x4, scoped, tag = 'scoped memory for tpu_custom_call.1']
    #allocation6 [shape = 's32[1]{0}', space=sflag, size = 0x4, scoped, tag = 'scoped memory for tpu_custom_call.1']
    #allocation7 [shape = 'u8[24576]{0}', space=vmem, size = 0x6000, scoped, tag = 'input window, operand 1, single buffered']
    #allocation8 [shape = 's32[1]{0}', space=sflag, size = 0x4, scoped, tag = 'scoped memory for tpu_custom_call.1']
    #allocation9 [shape = 'u8[8192]{0}', space=vmem, size = 0x2000, scoped, tag = 'output window, operand 0, single buffered']
    %7 = vsyncpa [#allocation5], 0
    %8 = vsyncpa [#allocation8], 0
    %9 = vsyncpa [#allocation6], 0
    // Predicated region
    $region2: #{tpu_custom_call.1} parent=1 // pred_check
      _
    $region3: #{tpu_custom_call.1} parent=1 // pred_check_branch
      %11 = sbr.rel (0) target = $region5
    $region4: #{tpu_custom_call.1} parent=1 // pred_region
      %s13 = ssub.s32 256, 256
      %14 = vsyncadd [#allocation5], %s13
      %s15 = sshll.u32 [#allocation4], 4
      %s16 = int_to_ptr.vmem [resolvable:$true] %s15
      %21 = dma.hbm_to_vmem [thread:$0]  %s0, 256, %s16, [#allocation5], 128, 128, 8
    $region5: #{tpu_custom_call.1} parent=1 // pred_fallthru
      _
    // Predicated region
    $region6: #{tpu_custom_call.1} parent=1 // pred_check
      _
    $region7: #{tpu_custom_call.1} parent=1 // pred_check_branch
      %23 = sbr.rel (0) target = $region9
    $region8: #{tpu_custom_call.1} parent=1 // pred_region
      %s25 = ssub.s32 768, 768
      %26 = vsyncadd [#allocation8], %s25
      %s27 = sshll.u32 [#allocation7], 4
      %s28 = int_to_ptr.vmem [resolvable:$true] %s27
      %33 = dma.hbm_to_vmem [thread:$0]  %s1, 768, %s28, [#allocation8], 192, 192, 12
    $region9: #{tpu_custom_call.1} parent=1 // pred_fallthru
      _
    // Predicated region
    $region10: #{tpu_custom_call.1} parent=1 // pred_check
      _
    $region11: #{tpu_custom_call.1} parent=1 // pred_check_branch
      %35 = sbr.rel (0) target = $region13
    $region12: #{tpu_custom_call.1} parent=1 // pred_region
      %36 = dma.done [#allocation5], 256
    $region13: #{tpu_custom_call.1} parent=1 // pred_fallthru
      _
    // Predicated region
    $region14: #{tpu_custom_call.1} parent=1 // pred_check
      _
    $region15: #{tpu_custom_call.1} parent=1 // pred_check_branch
      %38 = sbr.rel (0) target = $region17
    $region16: #{tpu_custom_call.1} parent=1 // pred_region
      %39 = dma.done [#allocation8], 768
    $region17: #{tpu_custom_call.1} parent=1 // pred_fallthru
      _
    %p41 = scmp.eq.s32.totalorder 0, 0
    // Predicated region
    $region18: #{tpu_custom_call.1} parent=1 // pred_check
      %p42 = pneg %p41
    $region19: #{tpu_custom_call.1} parent=1 // pred_check_branch
      %44 = sbr.rel (%p42) target = $region21
    $region20: #{tpu_custom_call.1} parent=1 // pred_region
      %v45 = vld [vmem:[#allocation4] sm:$0xff]
      %v46 = vld [vmem:[#allocation4 + $0x8] sm:$0xff]
      %v47 = vpack.c.bf16 %v46, %v45
      %v48 = vld [vmem:[#allocation7 + $0x4] sm:$0xff]
      %v49 = vld [vmem:[#allocation7 + $0x10] sm:$0xff]
      %v50 = vld [vmem:[#allocation7 + $0x1c] sm:$0xff]
      %v51 = vld [vmem:[#allocation7 + $0x28] sm:$0xff]
      %v56 = vunpack.c.l.b16 %v48
      %v57 = vunpack.c.h.b16 %v48
      %v58 = vunpack.c.l.b16 %v49
      %v59 = vunpack.c.h.b16 %v49
      %v60 = vunpack.c.l.b16 %v50
      %v61 = vunpack.c.h.b16 %v50
      %v62 = vunpack.c.l.b16 %v51
      %v63 = vunpack.c.h.b16 %v51
      %v64 = vpack.c.b16 %v58, %v56
      %v65 = vpack.c.b16 %v59, %v57
      %v66 = vpack.c.b16 %v62, %v60
      %v67 = vpack.c.b16 %v63, %v61
      %vm72 = vcmask 261120
      %v74 = vsel %vm72, %v47, 0
      %76 = vmatprep.subr.bf16.mxu0 %v65
      %77 = vmatpush1.bf16.msra.mxu0 %v64
      %78 = vmatprep.subr.bf16.mxu0 %v67
      %79 = vmatpush1.bf16.msra.mxu0 %v66
      %80 = vmatprep.subr.bf16.mxu0 0
      %81 = vmatpush1.bf16.msra.mxu0 0
      %82 = vmatprep.subr.bf16.mxu0 0
      %83 = vmatpush1.bf16.msra.mxu0 0
      %84 = vmatprep.subr.bf16.mxu0 0
      %85 = vmatpush1.bf16.msra.mxu0 0
      %86 = vmatprep.subr.bf16.mxu0 0
      %87 = vmatpush1.bf16.msra.mxu0 0
      %88 = vmatprep.subr.bf16.mxu0 0
      %89 = vmatpush1.bf16.msra.mxu0 0
      %90 = vmatprep.subr.bf16.mxu0 0
      %91 = vmatpush1.bf16.msra.mxu0 0
      %92 = vmatprep.subr.bf16.mxu0 0
      %93 = vmatpush1.bf16.msra.mxu0 0
      %94 = vmatprep.subr.bf16.mxu0 0
      %95 = vmatpush1.bf16.msra.mxu0 0
      %96 = vmatprep.subr.bf16.mxu0 0
      %97 = vmatpush1.bf16.msra.mxu0 0
      %98 = vmatprep.subr.bf16.mxu0 0
      %99 = vmatpush1.bf16.msra.mxu0 0
      %100 = vmatprep.subr.bf16.mxu0 0
      %101 = vmatpush1.bf16.msra.mxu0 0
      %102 = vmatprep.subr.bf16.mxu0 0
      %103 = vmatpush1.bf16.msra.mxu0 0
      %104 = vmatprep.subr.bf16.mxu0 0
      %105 = vmatpush1.bf16.msra.mxu0 0
      %106 = vmatprep.subr.bf16.mxu0 0
      %107 = vmatpush1.bf16.msra.mxu0 0
      %108 = vmatprep.mubr.bf16.mxu0 0
      %109 = vmatmul.mubr.bf16.gmra.mrb[0].mxu0 %v74
      %v110 = vpop.f32.mrb[0].mxu0
      %v111 = vadd.f32 0.0, %v110
      %v112 = vpop.f32.mrb[0].mxu0
      %v113 = vadd.f32 0.0, %v112
      %v114 = vpop.f32.mrb[0].mxu0
      %v115 = vadd.f32 0.0, %v114
      %v116 = vpop.f32.mrb[0].mxu0
      %v117 = vadd.f32 0.0, %v116
      %118 = vdwg.mxu0
      %v119 = vpack.c.bf16 %v111, %v111
      %v120 = vpack.c.bf16 %v115, %v115
      %121 = vst [vmem:[#allocation2] sm:$0xf] %v119
      %122 = vst [vmem:[#allocation2 + $0x4] sm:$0xf] %v120
      %v123 = vpack.c.bf16 %v113, %v113
      %v124 = vpack.c.bf16 %v117, %v117
      %125 = vst [vmem:[#allocation3] sm:$0xf] %v123
      %126 = vst [vmem:[#allocation3 + $0x4] sm:$0xf] %v124
    $region21: #{tpu_custom_call.1} parent=1 // pred_fallthru
      _
    %s127 = smul.u32 0, 8
    %s128 = scalar_lea.vmem [#allocation4], %s127
    %v129 = vld [vmem:[%s128] sm:$0xff]
    %v130 = vld [vmem:[%s128 + $0x8] sm:$0xff]
    %v131 = vpack.c.bf16 %v130, %v129
    %v132 = vld [vmem:[#allocation7] sm:$0xf]
    %v133 = vld [vmem:[#allocation7 + $0xc] sm:$0xf]
    %v134 = vld [vmem:[#allocation7 + $0x18] sm:$0xf]
    %v135 = vld [vmem:[#allocation7 + $0x24] sm:$0xf]
    %v140 = vunpack.c.l.b16 %v132
    %v141 = vunpack.c.l.b16 %v133
    %v142 = vunpack.c.l.b16 %v134
    %v143 = vunpack.c.l.b16 %v135
    %v144 = vpack.c.b16 %v141, %v140
    %v145 = vpack.c.b16 %v143, %v142
    %vm148 = vcmask 261120
    %v150 = vsel %vm148, %v131, 0
    %152 = vmatprep.subr.bf16.mxu0 0
    %153 = vmatpush1.bf16.msra.mxu0 %v144
    %154 = vmatprep.subr.bf16.mxu0 0
    %155 = vmatpush1.bf16.msra.mxu0 %v145
    %156 = vmatprep.subr.bf16.mxu0 0
    %157 = vmatpush1.bf16.msra.mxu0 0
    %158 = vmatprep.subr.bf16.mxu0 0
    %159 = vmatpush1.bf16.msra.mxu0 0
    %160 = vmatprep.subr.bf16.mxu0 0
    %161 = vmatpush1.bf16.msra.mxu0 0
    %162 = vmatprep.subr.bf16.mxu0 0
    %163 = vmatpush1.bf16.msra.mxu0 0
    %164 = vmatprep.subr.bf16.mxu0 0
    %165 = vmatpush1.bf16.msra.mxu0 0
    %166 = vmatprep.subr.bf16.mxu0 0
    %167 = vmatpush1.bf16.msra.mxu0 0
    %168 = vmatprep.subr.bf16.mxu0 0
    %169 = vmatpush1.bf16.msra.mxu0 0
    %170 = vmatprep.subr.bf16.mxu0 0
    %171 = vmatpush1.bf16.msra.mxu0 0
    %172 = vmatprep.subr.bf16.mxu0 0
    %173 = vmatpush1.bf16.msra.mxu0 0
    %174 = vmatprep.subr.bf16.mxu0 0
    %175 = vmatpush1.bf16.msra.mxu0 0
    %176 = vmatprep.subr.bf16.mxu0 0
    %177 = vmatpush1.bf16.msra.mxu0 0
    %178 = vmatprep.subr.bf16.mxu0 0
    %179 = vmatpush1.bf16.msra.mxu0 0
    %180 = vmatprep.subr.bf16.mxu0 0
    %181 = vmatpush1.bf16.msra.mxu0 0
    %182 = vmatprep.subr.bf16.mxu0 0
    %183 = vmatpush1.bf16.msra.mxu0 0
    %184 = vmatprep.mubr.bf16.mxu0 0
    %185 = vmatmul.mubr.bf16.gmra.mrb[0].mxu0 %v150
    %v186 = vpop.f32.mrb[0].mxu0
    %v187 = vadd.f32 0.0, %v186
    %v188 = vpop.f32.mrb[0].mxu0
    %v189 = vpop.f32.mrb[0].mxu0
    %v190 = vadd.f32 0.0, %v189
    %v191 = vpop.f32.mrb[0].mxu0
    %192 = vdwg.mxu0
    %v193 = vpack.c.bf16 %v187, %v187
    %v194 = vpack.c.bf16 %v190, %v190
    %v195 = vld [vmem:[#allocation2] sm:$0xf]
    %v196 = vld [vmem:[#allocation2 + $0x4] sm:$0xf]
    %197 = vmatprep.subr.bf16.mxu0 0
    %198 = vmatpush1.bf16.xpose.msra.mxu0 %v195
    %199 = vmatprep.subr.bf16.mxu0 0
    %200 = vmatpush1.bf16.xpose.msra.mxu0 0
    %201 = vmatprep.subr.bf16.mxu0 0
    %202 = vmatpush1.bf16.xpose.msra.mxu0 0
    %203 = vmatprep.subr.bf16.mxu0 0
    %204 = vmatpush1.bf16.xpose.msra.mxu0 0
    %205 = vmatprep.subr.bf16.mxu0 0
    %206 = vmatpush1.bf16.xpose.msra.mxu0 0
    %207 = vmatprep.subr.bf16.mxu0 0
    %208 = vmatpush1.bf16.xpose.msra.mxu0 0
    %209 = vmatprep.subr.bf16.mxu0 0
    %210 = vmatpush1.bf16.xpose.msra.mxu0 0
    %211 = vmatprep.subr.bf16.mxu0 0
    %212 = vmatpush1.bf16.xpose.msra.mxu0 0
    %213 = vmatprep.subr.bf16.mxu0 0
    %214 = vmatpush1.bf16.xpose.msra.mxu0 0
    %215 = vmatprep.subr.bf16.mxu0 0
    %216 = vmatpush1.bf16.xpose.msra.mxu0 0
    %217 = vmatprep.subr.bf16.mxu0 0
    %218 = vmatpush1.bf16.xpose.msra.mxu0 0
    %219 = vmatprep.subr.bf16.mxu0 0
    %220 = vmatpush1.bf16.xpose.msra.mxu0 0
    %221 = vmatprep.subr.bf16.mxu0 0
    %222 = vmatpush1.bf16.xpose.msra.mxu0 0
    %223 = vmatprep.subr.bf16.mxu0 0
    %224 = vmatpush1.bf16.xpose.msra.mxu0 0
    %225 = vmatprep.subr.bf16.mxu0 0
    %226 = vmatpush1.bf16.xpose.msra.mxu0 0
    %227 = vmatprep.subr.bf16.mxu0 0
    %228 = vmatpush1.bf16.xpose.msra.mxu0 0
    %229 = vmatprep.mubr.bf16.mxu0 0
    %230 = vmatmul.mubr.bf16.gmra.mrb[0].mxu0 %v193
    %v231 = vpop.f32.mrb[0].mxu0
    %v232 = vadd.f32 0.0, %v231
    %v233 = vpop.f32.mrb[0].mxu0
    %v234 = vpop.f32.mrb[0].mxu0
    %v235 = vpop.f32.mrb[0].mxu0
    %236 = vdwg.mxu0
    %237 = vmatprep.subr.bf16.mxu0 0
    %238 = vmatpush1.bf16.xpose.msra.mxu0 %v196
    %239 = vmatprep.subr.bf16.mxu0 0
    %240 = vmatpush1.bf16.xpose.msra.mxu0 0
    %241 = vmatprep.subr.bf16.mxu0 0
    %242 = vmatpush1.bf16.xpose.msra.mxu0 0
    %243 = vmatprep.subr.bf16.mxu0 0
    %244 = vmatpush1.bf16.xpose.msra.mxu0 0
    %245 = vmatprep.subr.bf16.mxu0 0
    %246 = vmatpush1.bf16.xpose.msra.mxu0 0
    %247 = vmatprep.subr.bf16.mxu0 0
    %248 = vmatpush1.bf16.xpose.msra.mxu0 0
    %249 = vmatprep.subr.bf16.mxu0 0
    %250 = vmatpush1.bf16.xpose.msra.mxu0 0
    %251 = vmatprep.subr.bf16.mxu0 0
    %252 = vmatpush1.bf16.xpose.msra.mxu0 0
    %253 = vmatprep.subr.bf16.mxu0 0
    %254 = vmatpush1.bf16.xpose.msra.mxu0 0
    %255 = vmatprep.subr.bf16.mxu0 0
    %256 = vmatpush1.bf16.xpose.msra.mxu0 0
    %257 = vmatprep.subr.bf16.mxu0 0
    %258 = vmatpush1.bf16.xpose.msra.mxu0 0
    %259 = vmatprep.subr.bf16.mxu0 0
    %260 = vmatpush1.bf16.xpose.msra.mxu0 0
    %261 = vmatprep.subr.bf16.mxu0 0
    %262 = vmatpush1.bf16.xpose.msra.mxu0 0
    %263 = vmatprep.subr.bf16.mxu0 0
    %264 = vmatpush1.bf16.xpose.msra.mxu0 0
    %265 = vmatprep.subr.bf16.mxu0 0
    %266 = vmatpush1.bf16.xpose.msra.mxu0 0
    %267 = vmatprep.subr.bf16.mxu0 0
    %268 = vmatpush1.bf16.xpose.msra.mxu0 0
    %269 = vmatprep.mubr.bf16.mxu0 0
    %270 = vmatmul.mubr.bf16.gmra.mrb[0].mxu0 %v194
    %v271 = vpop.f32.mrb[0].mxu0
    %v272 = vadd.f32 0.0, %v271
    %v273 = vpop.f32.mrb[0].mxu0
    %v274 = vpop.f32.mrb[0].mxu0
    %v275 = vpop.f32.mrb[0].mxu0
    %276 = vdwg.mxu0
    %v277 = vlaneseq
    %v278 = vshrl.u32 %v277, 7
    %v279 = vstv %s127
    %v280 = vadd.s32 %v279, %v278
    %v281 = vlaneseq
    %v282 = vand.u32 %v281, 127
    %vm283 = vcmp.gt.s32.totalorder %v282, %v280
    %v284 = vsel %vm283, -1e+30, %v232
    %v285 = vsel %vm283, -1e+30, %v272
    %vm286 = vcmask 64512
    %v287 = vsel %vm286, %v284, -inf
    %288 = vmax.xlane.f32.xlu0 %v287
    %v289 = vpop.xlane.xlu0 %288
    %v290 = vsel %vm286, %v285, -inf
    %291 = vmax.xlane.f32.xlu0 %v290
    %v292 = vpop.xlane.xlu0 %291
    %v293 = vsub.f32 %v284, %v289
    %v294 = vsub.f32 %v285, %v292
    %v295 = vmul.f32 %v293, 1.442695
    %v296 = vpow.pop %v295
    %v297 = vmul.f32 %v294, 1.442695
    %v298 = vpow.pop %v297
    %v299 = vsel %vm286, %v296, 0.0
    %300 = vadd.xlane.f32.xlu0 %v299
    %v301 = vpop.xlane.xlu0 %300
    %v302 = vsel %vm286, %v298, 0.0
    %303 = vadd.xlane.f32.xlu0 %v302
    %v304 = vpop.xlane.xlu0 %303
    %v305 = vrcp.pop %v301
    %v306 = vrcp.pop %v304
    %v307 = vmul.f32 %v296, %v305
    %v308 = vmul.f32 %v298, %v306
    %v309 = vpack.c.bf16 %v307, %v307
    %v310 = vpack.c.bf16 %v308, %v308
    %v311 = vld [vmem:[#allocation3] sm:$0xf]
    %v312 = vld [vmem:[#allocation3 + $0x4] sm:$0xf]
    %v314 = vsel %vm286, %v309, 0
    %vm316 = vcmask 1043456
    %v318 = vsel %vm316, %v311, 0
    %320 = vmatprep.subr.bf16.mxu0 0
    %321 = vmatpush1.bf16.msra.mxu0 %v318
    %322 = vmatprep.subr.bf16.mxu0 0
    %323 = vmatpush1.bf16.msra.mxu0 0
    %324 = vmatprep.subr.bf16.mxu0 0
    %325 = vmatpush1.bf16.msra.mxu0 0
    %326 = vmatprep.subr.bf16.mxu0 0
    %327 = vmatpush1.bf16.msra.mxu0 0
    %328 = vmatprep.subr.bf16.mxu0 0
    %329 = vmatpush1.bf16.msra.mxu0 0
    %330 = vmatprep.subr.bf16.mxu0 0
    %331 = vmatpush1.bf16.msra.mxu0 0
    %332 = vmatprep.subr.bf16.mxu0 0
    %333 = vmatpush1.bf16.msra.mxu0 0
    %334 = vmatprep.subr.bf16.mxu0 0
    %335 = vmatpush1.bf16.msra.mxu0 0
    %336 = vmatprep.subr.bf16.mxu0 0
    %337 = vmatpush1.bf16.msra.mxu0 0
    %338 = vmatprep.subr.bf16.mxu0 0
    %339 = vmatpush1.bf16.msra.mxu0 0
    %340 = vmatprep.subr.bf16.mxu0 0
    %341 = vmatpush1.bf16.msra.mxu0 0
    %342 = vmatprep.subr.bf16.mxu0 0
    %343 = vmatpush1.bf16.msra.mxu0 0
    %344 = vmatprep.subr.bf16.mxu0 0
    %345 = vmatpush1.bf16.msra.mxu0 0
    %346 = vmatprep.subr.bf16.mxu0 0
    %347 = vmatpush1.bf16.msra.mxu0 0
    %348 = vmatprep.subr.bf16.mxu0 0
    %349 = vmatpush1.bf16.msra.mxu0 0
    %350 = vmatprep.subr.bf16.mxu0 0
    %351 = vmatpush1.bf16.msra.mxu0 0
    %352 = vmatprep.mubr.bf16.mxu0 0
    %353 = vmatmul.mubr.bf16.gmra.mrb[0].mxu0 %v314
    %v354 = vpop.f32.mrb[0].mxu0
    %v355 = vadd.f32 0.0, %v354
    %v356 = vpop.f32.mrb[0].mxu0
    %v357 = vpop.f32.mrb[0].mxu0
    %v358 = vpop.f32.mrb[0].mxu0
    %359 = vdwg.mxu0
    %v361 = vsel %vm286, %v310, 0
    %v364 = vsel %vm316, %v312, 0
    %366 = vmatprep.subr.bf16.mxu0 0
    %367 = vmatpush1.bf16.msra.mxu0 %v364
    %368 = vmatprep.subr.bf16.mxu0 0
    %369 = vmatpush1.bf16.msra.mxu0 0
    %370 = vmatprep.subr.bf16.mxu0 0
    %371 = vmatpush1.bf16.msra.mxu0 0
    %372 = vmatprep.subr.bf16.mxu0 0
    %373 = vmatpush1.bf16.msra.mxu0 0
    %374 = vmatprep.subr.bf16.mxu0 0
    %375 = vmatpush1.bf16.msra.mxu0 0
    %376 = vmatprep.subr.bf16.mxu0 0
    %377 = vmatpush1.bf16.msra.mxu0 0
    %378 = vmatprep.subr.bf16.mxu0 0
    %379 = vmatpush1.bf16.msra.mxu0 0
    %380 = vmatprep.subr.bf16.mxu0 0
    %381 = vmatpush1.bf16.msra.mxu0 0
    %382 = vmatprep.subr.bf16.mxu0 0
    %383 = vmatpush1.bf16.msra.mxu0 0
    %384 = vmatprep.subr.bf16.mxu0 0
    %385 = vmatpush1.bf16.msra.mxu0 0
    %386 = vmatprep.subr.bf16.mxu0 0
    %387 = vmatpush1.bf16.msra.mxu0 0
    %388 = vmatprep.subr.bf16.mxu0 0
    %389 = vmatpush1.bf16.msra.mxu0 0
    %390 = vmatprep.subr.bf16.mxu0 0
    %391 = vmatpush1.bf16.msra.mxu0 0
    %392 = vmatprep.subr.bf16.mxu0 0
    %393 = vmatpush1.bf16.msra.mxu0 0
    %394 = vmatprep.subr.bf16.mxu0 0
    %395 = vmatpush1.bf16.msra.mxu0 0
    %396 = vmatprep.subr.bf16.mxu0 0
    %397 = vmatpush1.bf16.msra.mxu0 0
    %398 = vmatprep.mubr.bf16.mxu0 0
    %399 = vmatmul.mubr.bf16.gmra.mrb[0].mxu0 %v361
    %v400 = vpop.f32.mrb[0].mxu0
    %v401 = vadd.f32 0.0, %v400
    %v402 = vpop.f32.mrb[0].mxu0
    %v403 = vpop.f32.mrb[0].mxu0
    %v404 = vpop.f32.mrb[0].mxu0
    %405 = vdwg.mxu0
    %406 = vst [vmem:[#allocation9] sm:$0xff] %v355
    %407 = vst [vmem:[#allocation9 + $0x8] sm:$0xff] %v401
    // Predicated region
    $region22: #{tpu_custom_call.1} parent=1 // pred_check
      _
    $region23: #{tpu_custom_call.1} parent=1 // pred_check_branch
      %409 = sbr.rel (0) target = $region25
    $region24: #{tpu_custom_call.1} parent=1 // pred_region
      %s411 = ssub.s32 256, 256
      %412 = vsyncadd [#allocation6], %s411
      %s413 = sshll.u32 [#allocation9], 4
      %s414 = int_to_ptr.vmem [resolvable:$true] %s413
      %419 = dma.vmem_to_hbm [thread:$0]  %s414, 256, %s2, [#allocation6], 128, 128, 8
    $region25: #{tpu_custom_call.1} parent=1 // pred_fallthru
      _
    // Predicated region
    $region26: #{tpu_custom_call.1} parent=1 // pred_check
      _
    $region27: #{tpu_custom_call.1} parent=1 // pred_check_branch
      %421 = sbr.rel (0) target = $region29
    $region28: #{tpu_custom_call.1} parent=1 // pred_region
      %422 = dma.done [#allocation6], 256
    $region29: #{tpu_custom_call.1} parent=1 // pred_fallthru
      _
    %423 = vsyncpa [#allocation5], 1
    %424 = vsyncpa [#allocation8], 1
    %425 = vsyncpa [#allocation6], 1

</llo_original>
